<compile_context>
chip_gen: v5e
topology: v5e:2x2
jax: 0.10.0
libtpu: 0.0.40
codegen_flags: <defaults>
</compile_context>

<pallas_src>
import math

import jax
import jax.numpy as jnp
from jax.experimental import pallas as pl
from jax.experimental.pallas import tpu as pltpu

EPS = 1e-12  # matches torch.nn.functional.normalize default eps (clamp on the norm)


def _round_up(a, b):
    return (a + b - 1) // b * b


def _cdiv(a, b):
    return (a + b - 1) // b


# ----------------------- one-time (x-independent) weight preparation ----------------------
def prepare_weights(w1, w2, nb_proxy, cpt=None, dtype=jnp.bfloat16, tk_max=2048):
    """Concat fc1/fc2 weights, pad the class axis, permute to a proxy-major / class-minor
    column layout, store K-major in the compute dtype, and precompute inverse row norms.
    Done once; NOT on the per-forward hot path."""
    P = int(nb_proxy)
    if cpt is None:
        # 256-wide N tiles match the v6e/v7x MXU; for v5e's 128-wide MXU cpt=128 is equivalent.
        cpt = 256 if P == 1 else 128

    w = jnp.concatenate([w1, w2], axis=0).astype(jnp.float32)  # [C*P, D]
    O, D = w.shape
    assert O % P == 0, "Shape error"
    C = O // P
    C1 = w1.shape[0] // P

    # Balanced K tiling: one K step whenever D (128-padded) fits under tk_max, otherwise
    # even 128-aligned chunks (minimizes K padding).
    d128 = _round_up(D, 128)
    nk = _cdiv(d128, tk_max)
    tk = _round_up(_cdiv(d128, nk), 128)
    Dp = tk * nk

    Cp = _round_up(max(C, 1), cpt)

    # inverse row norms in f32 (padded rows get 0 -> cos = 0, no NaN)
    inv_w = 1.0 / jnp.maximum(jnp.sqrt(jnp.sum(w * w, axis=1)), EPS)  # [C*P]

    w3 = jnp.pad(w.reshape(C, P, D), ((0, Cp - C), (0, 0), (0, Dp - D)))
    inv3 = jnp.pad(inv_w.reshape(C, P), ((0, Cp - C), (0, 0)))

    # tile-major / proxy-major-within-tile / class-minor column order;
    # stored K-major [Dp, Cp*P] so the in-kernel dot is a plain (k,n) matmul (no transpose).
    nt = Cp // cpt
    w_perm = jnp.transpose(w3.reshape(nt, cpt, P, Dp), (0, 2, 1, 3)).reshape(Cp * P, Dp)
    w_kmaj = jnp.transpose(w_perm, (1, 0)).astype(dtype)                  # [Dp, Cp*P]
    invw_perm = jnp.transpose(inv3.reshape(nt, cpt, P), (0, 2, 1)).reshape(1, Cp * P)

    return {
        "w": w_kmaj,            # [Dp, Cp*P]  K-major, permuted, padded, compute dtype
        "inv_w": invw_perm,     # [1, Cp*P]   f32, permuted, padded (zeros on padded classes)
        "C": C, "C1": C1, "Cp": Cp, "P": P, "cpt": cpt,
        "D": D, "Dp": Dp, "tk": tk, "dtype": dtype,
    }


# -------------------------------- fused kernel ---------------------------------------------
def _make_fused_kernel(P, cpt):
    if P == 1:
        # Fast path: accumulate directly into the resident output tile (no acc scratch),
        # scale in place on the last K step.
        def kernel(x_ref, w_ref, invx_ref, invw_ref, out_ref):
            k = pl.program_id(2)

            @pl.when(k == 0)
            def _():
                out_ref[...] = jnp.zeros_like(out_ref)

            out_ref[...] += jnp.dot(x_ref[...], w_ref[...],
                                    preferred_element_type=jnp.float32)

            @pl.when(k == pl.num_programs(2) - 1)
            def _():
                out_ref[...] = out_ref[...] * invx_ref[...] * invw_ref[...]

        return kernel

    def kernel(x_ref, w_ref, invx_ref, invw_ref, out_ref, acc_ref):
        k = pl.program_id(2)

        @pl.when(k == 0)
        def _():
            acc_ref[...] = jnp.zeros_like(acc_ref)

        acc_ref[...] += jnp.dot(x_ref[...], w_ref[...],
                                preferred_element_type=jnp.float32)

        @pl.when(k == pl.num_programs(2) - 1)
        def _():
            # Streaming proxy-softmax epilogue: lanes are [p=0 classes | p=1 classes | ...],
            # so each proxy is a static 128/256-aligned slice.  Live vregs stay constant in P
            # (m, num, den + the current slice); cos slices are recomputed (cheap VPU work)
            # rather than held live.
            invx = invx_ref[...]                                   # [tm, 1]

            def cos_slice(p):
                return (acc_ref[:, p * cpt:(p + 1) * cpt] * invx
                        * invw_ref[:, p * cpt:(p + 1) * cpt])      # [tm, cpt]

            m = cos_slice(0)
            for p in range(1, P):
                m = jnp.maximum(m, cos_slice(p))
            num = jnp.zeros_like(m)
            den = jnp.zeros_like(m)
            for p in range(P):
                sp = cos_slice(p)
                ep = jnp.exp(sp - m)
                den = den + ep
                num = num + ep * sp
            out_ref[...] = num / den                               # [tm, cpt]

    return kernel


# -------------------------------- forward wrapper ------------------------------------------
def cosine_scores(x, prep, *, tm_max=512):
    """Proxy-reduced cosine scores [B, C] (no sigma), in ONE pallas_call."""
    P, cpt = prep["P"], prep["cpt"]
    C, Cp = prep["C"], prep["Cp"]
    D, Dp, tk = prep["D"], prep["Dp"], prep["tk"]
    w, inv_w = prep["w"], prep["inv_w"]
    dtype = prep["dtype"]

    B = x.shape[0]
    assert x.shape[1] == D, "feature-dim mismatch"
    Op = Cp * P
    tn = cpt * P

    xf = x.astype(jnp.float32)
    # precomputed inverse norms in f32 (O(B*D) glue; the kernel only does the epilogue scale)
    inv_x = 1.0 / jnp.maximum(jnp.sqrt(jnp.sum(xf * xf, axis=1, keepdims=True)), EPS)  # [B,1]

    # Balanced M tiling (minimize padding rows), 16-sublane aligned for bf16 packing.
    nm = max(1, _cdiv(B, tm_max))
    tm = _round_up(_cdiv(B, nm), 16)
    n_tiles_n = Op // tn
    if nm * n_tiles_n == 1 and B > 16:
        # v7x: a (1,1,K) parallel grid would idle one TensorCore; split M in two.
        nm = 2
        tm = _round_up(_cdiv(B, nm), 16)
    Bp = tm * nm

    x_in = xf.astype(dtype)
    if Bp != B or Dp != D:
        x_in = jnp.pad(x_in, ((0, Bp - B), (0, Dp - D)))
    invx_p = inv_x if Bp == B else jnp.pad(inv_x, ((0, Bp - B), (0, 0)))

    grid = (nm, n_tiles_n, Dp // tk)

    # Explicit scoped-VMEM budget for the double-buffered tiles (+ headroom), capped well
    # under v7x's 64 MiB physical VMEM.
    itemsize = jnp.dtype(dtype).itemsize
    vmem_bytes = (2 * (tm * tk + tk * tn) * itemsize    # x / w tiles, double-buffered
                  + 2 * tm * cpt * 4                    # output tile, double-buffered
                  + 2 * (tm + tn) * 4                   # inverse norms
                  + (tm * tn * 4 if P > 1 else 0))      # accumulator scratch
    vmem_limit = int(min(max(2 * vmem_bytes, 16 << 20), 32 << 20))

    scratch = [] if P == 1 else [pltpu.VMEM((tm, tn), jnp.float32)]

    scores = pl.pallas_call(
        _make_fused_kernel(P, cpt),
        out_shape=jax.ShapeDtypeStruct((Bp, Cp), jnp.float32),
        grid_spec=pltpu.PrefetchScalarGridSpec(
            num_scalar_prefetch=0,
            grid=grid,
            in_specs=[
                pl.BlockSpec((tm, tk), lambda i, j, k: (i, k)),   # x tile
                pl.BlockSpec((tk, tn), lambda i, j, k: (k, j)),   # w tile (K-major, permuted)
                pl.BlockSpec((tm, 1), lambda i, j, k: (i, 0)),    # 1/||x|| per row
                pl.BlockSpec((1, tn), lambda i, j, k: (0, j)),    # 1/||w|| per (permuted) col
            ],
            out_specs=pl.BlockSpec((tm, cpt), lambda i, j, k: (i, j)),
            scratch_shapes=scratch,
        ),
        compiler_params=pltpu.CompilerParams(
            dimension_semantics=("parallel", "parallel", "arbitrary"),
            vmem_limit_bytes=vmem_limit),
    )(x_in, w, invx_p, inv_w)

    return scores[:B, :C]


# ----------------------------- SplitCosineLinear forward ----------------------------------
def split_cosine_linear_forward(x, prep, sigma):
    """Reproduces SplitCosineLinear.forward (fc1/fc2 have sigma=False -> raw cosine sims)."""
    scores = cosine_scores(x, prep)          # [B, C] proxy-reduced cosine scores
    C1 = prep["C1"]
    old_scores = scores[:, :C1]
    new_scores = scores[:, C1:]
    # proxy softmax is per-class independent, so reduce(concat) == concat(reduce):
    logits = sigma * scores                  # sigma applied after reduction (plain-JAX glue)
    return {"old_scores": old_scores, "new_scores": new_scores, "logits": logits}


# ----------------------------- pure-JAX reference (for checking) --------------------------
def _ref_reduce_proxies(out, nb_proxy):
    if nb_proxy == 1:
        return out
    bs, o = out.shape
    c = o // nb_proxy
    s = out.reshape(bs, c, nb_proxy)
    att = jax.nn.softmax(s, axis=-1)
    return (att * s).sum(-1)


def _ref_forward(x, w1, w2, sigma, nb_proxy):
    def cos(xx, ww):
        xn = xx / jnp.maximum(jnp.linalg.norm(xx, axis=1, keepdims=True), EPS)
        wn = ww / jnp.maximum(jnp.linalg.norm(ww, axis=1, keepdims=True), EPS)
        return xn @ wn.T
    o1 = cos(x, w1)
    o2 = cos(x, w2)
    out = jnp.concatenate([o1, o2], axis=1)
    return {
        "old_scores": _ref_reduce_proxies(o1, nb_proxy),
        "new_scores": _ref_reduce_proxies(o2, nb_proxy),
        "logits": sigma * _ref_reduce_proxies(out, nb_proxy),
    }


if __name__ == "__main__":
    key = jax.random.PRNGKey(0)
    k_a, k_b = jax.random.split(key)

    # --- config 1: SplitCosineLinear(in=32, out1=4, out2=6, nb_proxy=2), sigma=1 (reset value)
    B, D = 2, 32
    C1, C2, P = 4, 6, 2
    kx, k1, k2 = jax.random.split(k_a, 3)
    x = jax.random.normal(kx, (B, D), dtype=jnp.float32)
    stdv = 1.0 / math.sqrt(D)
    w1 = jax.random.uniform(k1, (C1 * P, D), minval=-stdv, maxval=stdv, dtype=jnp.float32)
    w2 = jax.random.uniform(k2, (C2 * P, D), minval=-stdv, maxval=stdv, dtype=jnp.float32)
    sigma = 1.0
    ref = _ref_forward(x, w1, w2, sigma, P)

    # f32 mode: tight tolerance check of the fused algorithm
    prep_f32 = prepare_weights(w1, w2, P, dtype=jnp.float32)
    out_f32 = split_cosine_linear_forward(x, prep_f32, sigma)
    jax.block_until_ready(out_f32)
    for name in ("old_scores", "new_scores", "logits"):
        assert out_f32[name].shape == ref[name].shape, (name, out_f32[name].shape)
        assert jnp.allclose(out_f32[name], ref[name], atol=1e-5, rtol=1e-5), name

    # bf16 mode (default fast path): bf16 operands on the MXU, f32 accumulate/epilogue
    prep_bf = prepare_weights(w1, w2, P)
    out_bf = split_cosine_linear_forward(x, prep_bf, sigma)
    jax.block_until_ready(out_bf)
    for name in ("old_scores", "new_scores", "logits"):
        assert out_bf[name].shape == ref[name].shape, (name, out_bf[name].shape)
        assert jnp.allclose(out_bf[name], ref[name], atol=1e-2, rtol=1e-2), name

    # --- config 2: nb_proxy=1 path, non-unit sigma, multi-step K (D=3000 -> 2 K tiles + D pad)
    B2, D2, C1b, C2b, Pb = 4, 3000, 3, 5, 1
    kx2, k3, k4 = jax.random.split(k_b, 3)
    x2 = jax.random.normal(kx2, (B2, D2), dtype=jnp.float32)
    stdv2 = 1.0 / math.sqrt(D2)
    w1b = jax.random.uniform(k3, (C1b * Pb, D2), minval=-stdv2, maxval=stdv2, dtype=jnp.float32)
    w2b = jax.random.uniform(k4, (C2b * Pb, D2), minval=-stdv2, maxval=stdv2, dtype=jnp.float32)
    sigma2 = 2.0

    prep2 = prepare_weights(w1b, w2b, Pb)
    out2 = split_cosine_linear_forward(x2, prep2, sigma2)
    jax.block_until_ready(out2)

    ref2 = _ref_forward(x2, w1b, w2b, sigma2, Pb)
    for name in ("old_scores", "new_scores", "logits"):
        assert out2[name].shape == ref2[name].shape, (name, out2[name].shape)
        assert jnp.allclose(out2[name], ref2[name], atol=1e-2, rtol=1e-2), name

    print("KERNEL_OK")
</pallas_src>

<mosaic_0001>
module attributes {stable_mosaic.version = 11 : i64} {
  func.func @kernel(%arg0: i32, %arg1: i32, %arg2: i32, %arg3: memref<16x128xf32, #tpu.memory_space<vmem>>, %arg4: memref<128x256xf32, #tpu.memory_space<vmem>>, %arg5: memref<16x1xf32, #tpu.memory_space<vmem>>, %arg6: memref<1x256xf32, #tpu.memory_space<vmem>>, %arg7: memref<16x128xf32, #tpu.memory_space<vmem>>, %arg8: memref<16x256xf32, #tpu.memory_space<vmem>>) attributes {dimension_semantics = [#tpu.dimension_semantics<parallel>, #tpu.dimension_semantics<parallel>, #tpu.dimension_semantics<arbitrary>], iteration_bounds = array<i64: 1, 1, 1>, scalar_prefetch = 0 : i64, scratch_operands = 1 : i64, tpu.core_type = #tpu.core_type<tc>, window_params = [{transform_indices = @transform_0, window_bounds = array<i64: 16, 128>}, {transform_indices = @transform_1, window_bounds = array<i64: 128, 256>}, {transform_indices = @transform_2, window_bounds = array<i64: 16, 1>}, {transform_indices = @transform_3, window_bounds = array<i64: 1, 256>}, {transform_indices = @transform_4, window_bounds = array<i64: 16, 128>}]} {
    %c0_i32 = arith.constant 0 : i32
    %0 = arith.cmpi eq, %arg2, %c0_i32 : i32
    %1 = arith.extui %0 : i1 to i32
    %c0_i32_0 = arith.constant 0 : i32
    %2 = arith.cmpi ne, %1, %c0_i32_0 : i32
    scf.if %2 {
      %cst_10 = arith.constant 0.000000e+00 : f32
      %12 = vector.broadcast %cst_10 : f32 to vector<16x256xf32>
      %c0_11 = arith.constant 0 : index
      %c0_12 = arith.constant 0 : index
      %13 = vector.load %arg8[%c0_11, %c0_12] : memref<16x256xf32, #tpu.memory_space<vmem>>, vector<16x256xf32>
      tpu.vector_store %arg8[%c0_11, %c0_12], %12 {strides = array<i32>} : memref<16x256xf32, #tpu.memory_space<vmem>>, vector<16x256xf32>,
    } else {
    }
    %c0 = arith.constant 0 : index
    %c0_1 = arith.constant 0 : index
    %3 = vector.load %arg8[%c0, %c0_1] : memref<16x256xf32, #tpu.memory_space<vmem>>, vector<16x256xf32>
    %c0_2 = arith.constant 0 : index
    %c0_3 = arith.constant 0 : index
    %4 = vector.load %arg3[%c0_2, %c0_3] : memref<16x128xf32, #tpu.memory_space<vmem>>, vector<16x128xf32>
    %c0_4 = arith.constant 0 : index
    %c0_5 = arith.constant 0 : index
    %5 = vector.load %arg4[%c0_4, %c0_5] : memref<128x256xf32, #tpu.memory_space<vmem>>, vector<128x256xf32>
    %cst = arith.constant dense<0.000000e+00> : vector<16x256xf32>
    %6 = tpu.matmul %4, %5, %cst {dimension_numbers = #tpu.dot_dimension_numbers<[1], [0], [0], [1], [0, 0, 1, 1], [], []>} : vector<16x128xf32>, vector<128x256xf32>, vector<16x256xf32> -> vector<16x256xf32>
    %7 = arith.addf %3, %6 : vector<16x256xf32>
    %c0_6 = arith.constant 0 : index
    %c0_7 = arith.constant 0 : index
    %8 = vector.load %arg8[%c0_6, %c0_7] : memref<16x256xf32, #tpu.memory_space<vmem>>, vector<16x256xf32>
    tpu.vector_store %arg8[%c0_6, %c0_7], %7 {strides = array<i32>} : memref<16x256xf32, #tpu.memory_space<vmem>>, vector<16x256xf32>,
    %c0_i32_8 = arith.constant 0 : i32
    %9 = arith.cmpi eq, %arg2, %c0_i32_8 : i32
    %10 = arith.extui %9 : i1 to i32
    %c0_i32_9 = arith.constant 0 : i32
    %11 = arith.cmpi ne, %10, %c0_i32_9 : i32
    scf.if %11 {
      %c0_10 = arith.constant 0 : index
      %c0_11 = arith.constant 0 : index
      %12 = vector.load %arg5[%c0_10, %c0_11] : memref<16x1xf32, #tpu.memory_space<vmem>>, vector<16x1xf32>
      %c0_12 = arith.constant 0 : index
      %c0_13 = arith.constant 0 : index
      %13 = vector.load %arg8[%c0_12, %c0_13] : memref<16x256xf32, #tpu.memory_space<vmem>>, vector<16x128xf32>
      %14 = vector.broadcast %12 : vector<16x1xf32> to vector<16x128xf32>
      %15 = arith.mulf %13, %14 : vector<16x128xf32>
      %c0_14 = arith.constant 0 : index
      %c0_15 = arith.constant 0 : index
      %16 = vector.load %arg6[%c0_14, %c0_15] : memref<1x256xf32, #tpu.memory_space<vmem>>, vector<1x128xf32>
      %17 = vector.broadcast %16 : vector<1x128xf32> to vector<16x128xf32>
      %18 = arith.mulf %15, %17 : vector<16x128xf32>
      %c0_16 = arith.constant 0 : index
      %c128 = arith.constant 128 : index
      %19 = vector.load %arg8[%c0_16, %c128] : memref<16x256xf32, #tpu.memory_space<vmem>>, vector<16x128xf32>
      %20 = vector.broadcast %12 : vector<16x1xf32> to vector<16x128xf32>
      %21 = arith.mulf %19, %20 : vector<16x128xf32>
      %c0_17 = arith.constant 0 : index
      %c128_18 = arith.constant 128 : index
      %22 = vector.load %arg6[%c0_17, %c128_18] : memref<1x256xf32, #tpu.memory_space<vmem>>, vector<1x128xf32>
      %23 = vector.broadcast %22 : vector<1x128xf32> to vector<16x128xf32>
      %24 = arith.mulf %21, %23 : vector<16x128xf32>
      %25 = arith.maximumf %18, %24 : vector<16x128xf32>
      %cst_19 = arith.constant 0.000000e+00 : f32
      %26 = vector.broadcast %cst_19 : f32 to vector<16x128xf32>
      %cst_20 = arith.constant 0.000000e+00 : f32
      %27 = vector.broadcast %cst_20 : f32 to vector<16x128xf32>
      %c0_21 = arith.constant 0 : index
      %c0_22 = arith.constant 0 : index
      %28 = vector.load %arg8[%c0_21, %c0_22] : memref<16x256xf32, #tpu.memory_space<vmem>>, vector<16x128xf32>
      %29 = vector.broadcast %12 : vector<16x1xf32> to vector<16x128xf32>
      %30 = arith.mulf %28, %29 : vector<16x128xf32>
      %c0_23 = arith.constant 0 : index
      %c0_24 = arith.constant 0 : index
      %31 = vector.load %arg6[%c0_23, %c0_24] : memref<1x256xf32, #tpu.memory_space<vmem>>, vector<1x128xf32>
      %32 = vector.broadcast %31 : vector<1x128xf32> to vector<16x128xf32>
      %33 = arith.mulf %30, %32 : vector<16x128xf32>
      %34 = arith.subf %33, %25 : vector<16x128xf32>
      %35 = math.exp %34 : vector<16x128xf32>
      %36 = arith.addf %27, %35 : vector<16x128xf32>
      %37 = arith.mulf %35, %33 : vector<16x128xf32>
      %38 = arith.addf %26, %37 : vector<16x128xf32>
      %c0_25 = arith.constant 0 : index
      %c128_26 = arith.constant 128 : index
      %39 = vector.load %arg8[%c0_25, %c128_26] : memref<16x256xf32, #tpu.memory_space<vmem>>, vector<16x128xf32>
      %40 = vector.broadcast %12 : vector<16x1xf32> to vector<16x128xf32>
      %41 = arith.mulf %39, %40 : vector<16x128xf32>
      %c0_27 = arith.constant 0 : index
      %c128_28 = arith.constant 128 : index
      %42 = vector.load %arg6[%c0_27, %c128_28] : memref<1x256xf32, #tpu.memory_space<vmem>>, vector<1x128xf32>
      %43 = vector.broadcast %42 : vector<1x128xf32> to vector<16x128xf32>
      %44 = arith.mulf %41, %43 : vector<16x128xf32>
      %45 = arith.subf %44, %25 : vector<16x128xf32>
      %46 = math.exp %45 : vector<16x128xf32>
      %47 = arith.addf %36, %46 : vector<16x128xf32>
      %48 = arith.mulf %46, %44 : vector<16x128xf32>
      %49 = arith.addf %38, %48 : vector<16x128xf32>
      %50 = arith.divf %49, %47 : vector<16x128xf32>
      %c0_29 = arith.constant 0 : index
      %c0_30 = arith.constant 0 : index
      %51 = vector.load %arg7[%c0_29, %c0_30] : memref<16x128xf32, #tpu.memory_space<vmem>>, vector<16x128xf32>
      tpu.vector_store %arg7[%c0_29, %c0_30], %50 {strides = array<i32>} : memref<16x128xf32, #tpu.memory_space<vmem>>, vector<16x128xf32>,
    } else {
    }
    return
  }
  func.func @transform_0(%arg0: i32, %arg1: i32, %arg2: i32) -> (i32, i32) {
    %c0_i32 = arith.constant 0 : i32
    return %arg0, %arg2 : i32, i32
  }
  func.func @transform_1(%arg0: i32, %arg1: i32, %arg2: i32) -> (i32, i32) {
    %c0_i32 = arith.constant 0 : i32
    return %arg2, %arg1 : i32, i32
  }
  func.func @transform_2(%arg0: i32, %arg1: i32, %arg2: i32) -> (i32, i32) {
    %c0_i32 = arith.constant 0 : i32
    %c0_i32_0 = arith.constant 0 : i32
    return %arg0, %c0_i32 : i32, i32
  }
  func.func @transform_3(%arg0: i32, %arg1: i32, %arg2: i32) -> (i32, i32) {
    %c0_i32 = arith.constant 0 : i32
    %c0_i32_0 = arith.constant 0 : i32
    return %c0_i32, %arg1 : i32, i32
  }
  func.func @transform_4(%arg0: i32, %arg1: i32, %arg2: i32) -> (i32, i32) {
    %c0_i32 = arith.constant 0 : i32
    return %arg0, %arg1 : i32, i32
  }
}

</mosaic_0001>

<llo_original>
// kernel: tpu_custom_call.1
$region0: #{tpu_custom_call.1}
  #allocation0 [shape = 'u32[]', space=smem, size = 0x4, offset = 0x4, fixed_abs, tag = 'smem constant byte address 0x4 - core index']
  #allocation1 [shape = 'u32[72,128]{1,0:T(1,128)}', space=vmem, size = 0x9000, scoped, tag = 'internal scratch']
  #allocation2 [shape = 'f32[16,256]{1,0:T(8,128)}', space=vmem, size = 0x4000, scoped, tag = 'scratch operand']
  %s0 = inlined_call_operand.vmem [shape: f32[16,128], index: 0, kind: input, shape index: {}]
  %s1 = inlined_call_operand.hbm [shape: f32[128,256], index: 1, kind: input, shape index: {}]
  %s2 = inlined_call_operand.vmem [shape: f32[16,1], index: 2, kind: input, shape index: {}]
  %s3 = inlined_call_operand.hbm [shape: f32[1,256], index: 3, kind: input, shape index: {}]
  %s4 = inlined_call_operand.hbm [shape: f32[16,128], index: 4, kind: output, shape index: {}]
  %s5 = sld [smem:[#allocation0]]
  $region42: #{tpu_custom_call.1} parent=0
    _
  %s7 = ssub.s32 1, %s5
  %s8 = scalar_select 0, %s7, %s5
  $region1: #{tpu_custom_call.1} parent=0
    #allocation3 [shape = 'u8[131072]{0}', space=vmem, size = 0x20000, scoped, tag = 'input window, operand 1, single buffered']
    #allocation4 [shape = 's32[1]{0}', space=sflag, size = 0x4, scoped, tag = 'scoped memory for tpu_custom_call.1']
    #allocation5 [shape = 's32[1]{0}', space=sflag, size = 0x4, scoped, tag = 'scoped memory for tpu_custom_call.1']
    #allocation6 [shape = 'u8[1024]{0}', space=vmem, size = 0x400, scoped, tag = 'input window, operand 3, single buffered']
    #allocation7 [shape = 's32[1]{0}', space=sflag, size = 0x4, scoped, tag = 'scoped memory for tpu_custom_call.1']
    #allocation8 [shape = 'u8[8192]{0}', space=vmem, size = 0x2000, scoped, tag = 'output window, operand 0, single buffered']
    %9 = vsyncpa [#allocation4], 0
    %10 = vsyncpa [#allocation7], 0
    %11 = vsyncpa [#allocation5], 0
    // Predicated region
    $region2: #{tpu_custom_call.1} parent=1 // pred_check
      _
    $region3: #{tpu_custom_call.1} parent=1 // pred_check_branch
      %13 = sbr.rel (0) target = $region5
    $region4: #{tpu_custom_call.1} parent=1 // pred_region
      _
    $region5: #{tpu_custom_call.1} parent=1 // pred_fallthru
      _
    // Predicated region
    $region6: #{tpu_custom_call.1} parent=1 // pred_check
      _
    $region7: #{tpu_custom_call.1} parent=1 // pred_check_branch
      %15 = sbr.rel (0) target = $region9
    $region8: #{tpu_custom_call.1} parent=1 // pred_region
      %17 = vsyncadd [#allocation4], 0
      %s18 = sshll.u32 %s1, 4
      %s19 = int_to_ptr.hbm [resolvable:$true] %s18
      %s20 = sshll.u32 [#allocation3], 4
      %s21 = int_to_ptr.vmem [resolvable:$true] %s20
      %26 = dma.hbm_to_vmem [thread:$0]  %s19, 4096, %s21, [#allocation4], 256, 256, 16
    $region9: #{tpu_custom_call.1} parent=1 // pred_fallthru
      _
    // Predicated region
    $region10: #{tpu_custom_call.1} parent=1 // pred_check
      _
    $region11: #{tpu_custom_call.1} parent=1 // pred_check_branch
      %28 = sbr.rel (0) target = $region13
    $region12: #{tpu_custom_call.1} parent=1 // pred_region
      _
    $region13: #{tpu_custom_call.1} parent=1 // pred_fallthru
      _
    // Predicated region
    $region14: #{tpu_custom_call.1} parent=1 // pred_check
      _
    $region15: #{tpu_custom_call.1} parent=1 // pred_check_branch
      %30 = sbr.rel (0) target = $region17
    $region16: #{tpu_custom_call.1} parent=1 // pred_region
      %32 = vsyncadd [#allocation7], 0
      %s34 = sshll.u32 %s3, 4
      %s35 = int_to_ptr.hbm [resolvable:$true] %s34
      %s36 = sshll.u32 [#allocation6], 4
      %s37 = int_to_ptr.vmem [resolvable:$true] %s36
      %39 = dma.hbm_to_vmem [thread:$0]  %s35, 32, %s37, [#allocation7]
    $region17: #{tpu_custom_call.1} parent=1 // pred_fallthru
      _
    // Predicated region
    $region18: #{tpu_custom_call.1} parent=1 // pred_check
      _
    $region19: #{tpu_custom_call.1} parent=1 // pred_check_branch
      %41 = sbr.rel (0) target = $region21
    $region20: #{tpu_custom_call.1} parent=1 // pred_region
      %43 = dma.done [#allocation4], 4096
    $region21: #{tpu_custom_call.1} parent=1 // pred_fallthru
      _
    // Predicated region
    $region22: #{tpu_custom_call.1} parent=1 // pred_check
      _
    $region23: #{tpu_custom_call.1} parent=1 // pred_check_branch
      %45 = sbr.rel (0) target = $region25
    $region24: #{tpu_custom_call.1} parent=1 // pred_region
      %47 = dma.done [#allocation7], 32
    $region25: #{tpu_custom_call.1} parent=1 // pred_fallthru
      _
    %p48 = scmp.eq.s32.totalorder 0, 0
    // Predicated region
    $region26: #{tpu_custom_call.1} parent=1 // pred_check
      %p49 = pneg %p48
    $region27: #{tpu_custom_call.1} parent=1 // pred_check_branch
      %51 = sbr.rel (%p49) target = $region29
    $region28: #{tpu_custom_call.1} parent=1 // pred_region
      %52 = vst [vmem:[#allocation2] sm:$0xff] 0.0
      %53 = vst [vmem:[#allocation2 + $0x8] sm:$0xff] 0.0
      %54 = vst [vmem:[#allocation2 + $0x10] sm:$0xff] 0.0
      %55 = vst [vmem:[#allocation2 + $0x18] sm:$0xff] 0.0
    $region29: #{tpu_custom_call.1} parent=1 // pred_fallthru
      _
    %v56 = vld [vmem:[#allocation2] sm:$0xff]
    %v57 = vld [vmem:[#allocation2 + $0x8] sm:$0xff]
    %v58 = vld [vmem:[#allocation2 + $0x10] sm:$0xff]
    %v59 = vld [vmem:[#allocation2 + $0x18] sm:$0xff]
    %v60 = vld [vmem:[%s0] sm:$0xff]
    %v61 = vld [vmem:[%s0 + $0x8] sm:$0xff]
    %v62 = vld [vmem:[#allocation3] sm:$0xff]
    %v63 = vld [vmem:[#allocation3 + $0x8] sm:$0xff]
    %v64 = vld [vmem:[#allocation3 + $0x10] sm:$0xff]
    %v65 = vld [vmem:[#allocation3 + $0x18] sm:$0xff]
    %v66 = vld [vmem:[#allocation3 + $0x20] sm:$0xff]
    %v67 = vld [vmem:[#allocation3 + $0x28] sm:$0xff]
    %v68 = vld [vmem:[#allocation3 + $0x30] sm:$0xff]
    %v69 = vld [vmem:[#allocation3 + $0x38] sm:$0xff]
    %v70 = vld [vmem:[#allocation3 + $0x40] sm:$0xff]
    %v71 = vld [vmem:[#allocation3 + $0x48] sm:$0xff]
    %v72 = vld [vmem:[#allocation3 + $0x50] sm:$0xff]
    %v73 = vld [vmem:[#allocation3 + $0x58] sm:$0xff]
    %v74 = vld [vmem:[#allocation3 + $0x60] sm:$0xff]
    %v75 = vld [vmem:[#allocation3 + $0x68] sm:$0xff]
    %v76 = vld [vmem:[#allocation3 + $0x70] sm:$0xff]
    %v77 = vld [vmem:[#allocation3 + $0x78] sm:$0xff]
    %v78 = vld [vmem:[#allocation3 + $0x80] sm:$0xff]
    %v79 = vld [vmem:[#allocation3 + $0x88] sm:$0xff]
    %v80 = vld [vmem:[#allocation3 + $0x90] sm:$0xff]
    %v81 = vld [vmem:[#allocation3 + $0x98] sm:$0xff]
    %v82 = vld [vmem:[#allocation3 + $0xa0] sm:$0xff]
    %v83 = vld [vmem:[#allocation3 + $0xa8] sm:$0xff]
    %v84 = vld [vmem:[#allocation3 + $0xb0] sm:$0xff]
    %v85 = vld [vmem:[#allocation3 + $0xb8] sm:$0xff]
    %v86 = vld [vmem:[#allocation3 + $0xc0] sm:$0xff]
    %v87 = vld [vmem:[#allocation3 + $0xc8] sm:$0xff]
    %v88 = vld [vmem:[#allocation3 + $0xd0] sm:$0xff]
    %v89 = vld [vmem:[#allocation3 + $0xd8] sm:$0xff]
    %v90 = vld [vmem:[#allocation3 + $0xe0] sm:$0xff]
    %v91 = vld [vmem:[#allocation3 + $0xe8] sm:$0xff]
    %v92 = vld [vmem:[#allocation3 + $0xf0] sm:$0xff]
    %v93 = vld [vmem:[#allocation3 + $0xf8] sm:$0xff]
    %94 = vmatpush.msra.mxu0 %v92
    %95 = vmatpush.msra.mxu0 %v90
    %96 = vmatpush.msra.mxu0 %v88
    %97 = vmatpush.msra.mxu0 %v86
    %98 = vmatpush.msra.mxu0 %v84
    %99 = vmatpush.msra.mxu0 %v82
    %100 = vmatpush.msra.mxu0 %v80
    %101 = vmatpush.msra.mxu0 %v78
    %102 = vmatpush.msra.mxu0 %v76
    %103 = vmatpush.msra.mxu0 %v74
    %104 = vmatpush.msra.mxu0 %v72
    %105 = vmatpush.msra.mxu0 %v70
    %106 = vmatpush.msra.mxu0 %v68
    %107 = vmatpush.msra.mxu0 %v66
    %108 = vmatpush.msra.mxu0 %v64
    %109 = vmatpush.msra.mxu0 %v62
    %110 = vmatmul.f32.gmra.mxu0 %v60
    %v111 = vpop.f32.mrf.mxu0
    %v112 = vadd.f32 0.0, %v111
    %113 = vmatmul.f32.gmra.mxu0 %v61
    %v114 = vpop.f32.mrf.mxu0
    %v115 = vadd.f32 0.0, %v114
    %116 = vdwg.mxu0
    %117 = vmatpush.msra.mxu0 %v93
    %118 = vmatpush.msra.mxu0 %v91
    %119 = vmatpush.msra.mxu0 %v89
    %120 = vmatpush.msra.mxu0 %v87
    %121 = vmatpush.msra.mxu0 %v85
    %122 = vmatpush.msra.mxu0 %v83
    %123 = vmatpush.msra.mxu0 %v81
    %124 = vmatpush.msra.mxu0 %v79
    %125 = vmatpush.msra.mxu0 %v77
    %126 = vmatpush.msra.mxu0 %v75
    %127 = vmatpush.msra.mxu0 %v73
    %128 = vmatpush.msra.mxu0 %v71
    %129 = vmatpush.msra.mxu0 %v69
    %130 = vmatpush.msra.mxu0 %v67
    %131 = vmatpush.msra.mxu0 %v65
    %132 = vmatpush.msra.mxu0 %v63
    %133 = vmatmul.f32.gmra.mxu0 %v60
    %v134 = vpop.f32.mrf.mxu0
    %v135 = vadd.f32 0.0, %v134
    %136 = vmatmul.f32.gmra.mxu0 %v61
    %v137 = vpop.f32.mrf.mxu0
    %v138 = vadd.f32 0.0, %v137
    %139 = vdwg.mxu0
    %v140 = vadd.f32 %v56, %v112
    %v141 = vadd.f32 %v57, %v135
    %v142 = vadd.f32 %v58, %v115
    %v143 = vadd.f32 %v59, %v138
    %144 = vst [vmem:[#allocation2] sm:$0xff] %v140
    %145 = vst [vmem:[#allocation2 + $0x8] sm:$0xff] %v141
    %146 = vst [vmem:[#allocation2 + $0x10] sm:$0xff] %v142
    %147 = vst [vmem:[#allocation2 + $0x18] sm:$0xff] %v143
    // Predicated region
    $region30: #{tpu_custom_call.1} parent=1 // pred_check
      %p148 = pneg %p48
    $region31: #{tpu_custom_call.1} parent=1 // pred_check_branch
      %150 = sbr.rel (%p148) target = $region33
    $region32: #{tpu_custom_call.1} parent=1 // pred_region
      %v151 = vld [vmem:[%s2] sm:$0xff]
      %v152 = vld [vmem:[%s2 + $0x8] sm:$0xff]
      %v153 = vld [vmem:[#allocation2] sm:$0xff]
      %v154 = vld [vmem:[#allocation2 + $0x10] sm:$0xff]
      %156 = vset.pattern.permute.xlu0 0
      %157 = vperm.xlu0 %156, %v151
      %v158 = vpop.permute.xlu0 %157
      %161 = vset.pattern.permute.xlu0 0
      %162 = vperm.xlu0 %161, %v152
      %v163 = vpop.permute.xlu0 %162
      %v165 = vmul.f32 %v153, %v158
      %v166 = vmul.f32 %v154, %v163
      %v167 = vld [vmem:[#allocation6] sm:$0x1]
      %v169 = vperm.slane %v167, 0
      %v171 = vmul.f32 %v165, %v169
      %v172 = vmul.f32 %v166, %v169
      %v173 = vld [vmem:[#allocation2 + $0x8] sm:$0xff]
      %v174 = vld [vmem:[#allocation2 + $0x18] sm:$0xff]
      %v175 = vmul.f32 %v173, %v158
      %v176 = vmul.f32 %v174, %v163
      %v177 = vld [vmem:[#allocation6 + $0x1] sm:$0x1]
      %v179 = vperm.slane %v177, 0
      %v181 = vmul.f32 %v175, %v179
      %v182 = vmul.f32 %v176, %v179
      %v183 = vmax.f32 %v171, %v181
      %v184 = vmax.f32 %v172, %v182
      %v185 = vsub.f32 %v171, %v183
      %v186 = vsub.f32 %v172, %v184
      %v187 = vmul.f32 %v185, 1.442695
      %v188 = vpow.pop %v187
      %v189 = vmul.f32 %v186, 1.442695
      %v190 = vpow.pop %v189
      %v191 = vadd.f32 %v188, 0.0
      %v192 = vadd.f32 %v190, 0.0
      %v193 = vmul.f32 %v188, %v171
      %v194 = vmul.f32 %v190, %v172
      %v195 = vadd.f32 %v193, 0.0
      %v196 = vadd.f32 %v194, 0.0
      %v197 = vsub.f32 %v181, %v183
      %v198 = vsub.f32 %v182, %v184
      %v199 = vmul.f32 %v197, 1.442695
      %v200 = vpow.pop %v199
      %v201 = vmul.f32 %v198, 1.442695
      %v202 = vpow.pop %v201
      %v203 = vadd.f32 %v191, %v200
      %v204 = vadd.f32 %v192, %v202
      %v205 = vmul.f32 %v200, %v181
      %v206 = vmul.f32 %v202, %v182
      %v207 = vadd.f32 %v195, %v205
      %v208 = vadd.f32 %v196, %v206
      %v209 = vrcp.pop %v203
      %v210 = vmul.f32 %v203, %v209
      %v211 = vsub.f32 1.0, %v210
      %v212 = vmul.f32 %v209, %v211
      %v213 = vadd.f32 %v209, %v212
      %vm214 = vweird.f32 %v203
      %vm215 = vweird.f32 %v209
      %vm216 = vmor %vm214, %vm215
      %v217 = vsel %vm216, %v209, %v213
      %v218 = vand.u32 2147483647, %v203
      %vm219 = vcmp.eq.f32.partialorder %v218, 8.507059e+37
      %v220 = vand.u32 %v203, 2147483648
      %v221 = vor.u32 1.1754944e-38, %v220
      %v222 = vsel %vm219, %v221, %v217
      %v223 = vmul.f32 %v207, %v222
      %v224 = vrcp.pop %v204
      %v225 = vmul.f32 %v204, %v224
      %v226 = vsub.f32 1.0, %v225
      %v227 = vmul.f32 %v224, %v226
      %v228 = vadd.f32 %v224, %v227
      %vm229 = vweird.f32 %v204
      %vm230 = vweird.f32 %v224
      %vm231 = vmor %vm229, %vm230
      %v232 = vsel %vm231, %v224, %v228
      %v233 = vand.u32 2147483647, %v204
      %vm234 = vcmp.eq.f32.partialorder %v233, 8.507059e+37
      %v235 = vand.u32 %v204, 2147483648
      %v236 = vor.u32 1.1754944e-38, %v235
      %v237 = vsel %vm234, %v236, %v232
      %v238 = vmul.f32 %v208, %v237
      %239 = vst [vmem:[#allocation8] sm:$0xff] %v223
      %240 = vst [vmem:[#allocation8 + $0x8] sm:$0xff] %v238
    $region33: #{tpu_custom_call.1} parent=1 // pred_fallthru
      _
    // Predicated region
    $region34: #{tpu_custom_call.1} parent=1 // pred_check
      _
    $region35: #{tpu_custom_call.1} parent=1 // pred_check_branch
      %242 = sbr.rel (0) target = $region37
    $region36: #{tpu_custom_call.1} parent=1 // pred_region
      %244 = vsyncadd [#allocation5], 0
      %s245 = sshll.u32 [#allocation8], 4
      %s246 = int_to_ptr.vmem [resolvable:$true] %s245
      %s247 = sshll.u32 %s4, 4
      %s248 = int_to_ptr.hbm [resolvable:$true] %s247
      %253 = dma.vmem_to_hbm [thread:$0]  %s246, 256, %s248, [#allocation5], 128, 128, 8
    $region37: #{tpu_custom_call.1} parent=1 // pred_fallthru
      _
    // Predicated region
    $region38: #{tpu_custom_call.1} parent=1 // pred_check
      _
    $region39: #{tpu_custom_call.1} parent=1 // pred_check_branch
      %255 = sbr.rel (0) target = $region41
    $region40: #{tpu_custom_call.1} parent=1 // pred_region
      %257 = dma.done [#allocation5], 256
    $region41: #{tpu_custom_call.1} parent=1 // pred_fallthru
      _
    %258 = vsyncpa [#allocation4], 1
    %259 = vsyncpa [#allocation7], 1
    %260 = vsyncpa [#allocation5], 1

</llo_original>
